<compile_context>
chip_gen: v7x
topology: tpu7x:2x2x1
jax: 0.10.0
libtpu: 0.0.40
codegen_flags: <defaults>
</compile_context>

<pallas_src>
import jax
import jax.numpy as jnp
from jax.experimental import pallas as pl
from jax.experimental.pallas import tpu as pltpu

IN_FEATURES = 4
OUT_FEATURES = 8
TB_CAP = 8192  # rows per block; 4 double-buffered lane-padded blocks ~= 16 MiB VMEM


def _round_up(n, m):
    return ((n + m - 1) // m) * m


def linear_kernel(x_ref, wt_ref, b_ref, o_ref):
    """x_ref: (tb, IN), wt_ref: (IN, OUT), b_ref: (1, OUT), o_ref: (tb, OUT).

    Tiny-K/tiny-N contraction kept on the VPU: 4 fully-unrolled broadcast
    multiply-adds over already-resident vregs; bias folded into the init.
    """
    x = x_ref[...]                            # (tb, IN)
    wt = wt_ref[...]                          # (IN, OUT)
    acc = b_ref[...] + x[:, 0:1] * wt[0:1, :]  # (tb, OUT)
    for k in range(1, IN_FEATURES):           # 3 more VPU FMAs
        acc = acc + x[:, k:k + 1] * wt[k:k + 1, :]
    o_ref[...] = acc.astype(o_ref.dtype)


def _pick_batch_tile(batch):
    """Choose an 8-aligned row tile.

    * batch <= 256: single block (overhead-dominated regardless).
    * otherwise: at least 2 blocks (feeds both v7x TensorCores + enables
      double-buffering), capped at TB_CAP by the VMEM budget above.
    """
    if batch <= 256:
        return batch
    return min(TB_CAP, _round_up(pl.cdiv(batch, 2), 8))


def linear_pallas(x, wt, b_row):
    """x: (B, IN), wt: (IN, OUT), b_row: (1, OUT) -> (B, OUT). Natural layout."""
    batch = x.shape[0]
    tb = _pick_batch_tile(batch)
    grid = (pl.cdiv(batch, tb),)
    itemsize = jnp.dtype(x.dtype).itemsize
    cost = pl.CostEstimate(
        flops=2 * batch * IN_FEATURES * OUT_FEATURES,
        transcendentals=0,
        bytes_accessed=(x.size + wt.size + b_row.size
                        + batch * OUT_FEATURES) * itemsize,
    )
    return pl.pallas_call(
        linear_kernel,
        out_shape=jax.ShapeDtypeStruct((batch, OUT_FEATURES), x.dtype),
        grid=grid,
        in_specs=[
            pl.BlockSpec((tb, IN_FEATURES), lambda i: (i, 0)),
            pl.BlockSpec((IN_FEATURES, OUT_FEATURES), lambda i: (0, 0)),
            pl.BlockSpec((1, OUT_FEATURES), lambda i: (0, 0)),
        ],
        out_specs=pl.BlockSpec((tb, OUT_FEATURES), lambda i: (i, 0)),
        compiler_params=pltpu.CompilerParams(
            dimension_semantics=("parallel",),  # shards rows across v7x's 2 TCs
        ),
        cost_estimate=cost,
    )(x, wt, b_row)


def model_forward(x1, w, b, other=None):
    """Mirrors Model.forward.

    w is stored as PyTorch does: (OUT, IN). x1 may be 1-D (IN,) or 2-D (B, IN).
    `v2 = v1 + other if other else v1` uses *tensor truthiness* in PyTorch: it
    only ever adds when `other` is a truthy scalar (multi-element tensors
    raise), so the add is folded into the bias — fully fused, no extra HBM
    round-trip.  NOTE: this truthiness branch concretizes `other`, so it is
    not jittable with a traced `other` (matches the torch semantics, which
    also require a concrete value).
    """
    squeeze = x1.ndim == 1
    x2d = x1.reshape(1, IN_FEATURES) if squeeze else x1

    eff_bias = b
    if other is not None:
        arr = jnp.asarray(other)
        if arr.size != 1:
            raise ValueError(
                "Boolean value of an array with more than one element is "
                "ambiguous (matches torch semantics of `if other`).")
        if bool(arr.reshape(())):
            eff_bias = b + arr.reshape(()).astype(b.dtype)

    # w.T is a 4x8 constant-sized transform (32 floats) — negligible.
    out = linear_pallas(x2d, w.T, eff_bias.reshape(1, OUT_FEATURES))
    return out.reshape(OUT_FEATURES) if squeeze else out


if __name__ == "__main__":
    key = jax.random.PRNGKey(0)
    kx, kw, kb, kxb = jax.random.split(key, 4)

    # Deterministic synthetic parameters, nn.Linear(4, 8) shapes (PyTorch layout).
    w = jax.random.normal(kw, (OUT_FEATURES, IN_FEATURES), dtype=jnp.float32) * 0.1
    b = jax.random.normal(kb, (OUT_FEATURES,), dtype=jnp.float32) * 0.1

    # Case 1: the spec's input, x1 = torch.randn(4), other=None.
    x1 = jax.random.normal(kx, (IN_FEATURES,), dtype=jnp.float32)
    out = model_forward(x1, w, b)
    jax.block_until_ready(out)
    ref = x1 @ w.T + b
    assert out.shape == (OUT_FEATURES,)
    assert jnp.allclose(out, ref, atol=1e-5, rtol=1e-5), "mismatch vs reference (B=1)"

    # Case 2: batched + ragged input — exercises grid=(2,), partial last block,
    # natural-layout blocks, and the "parallel" batch axis.
    xb = jax.random.normal(kxb, (300, IN_FEATURES), dtype=jnp.float32)
    outb = model_forward(xb, w, b)
    jax.block_until_ready(outb)
    refb = xb @ w.T + b
    assert outb.shape == (300, OUT_FEATURES)
    assert jnp.allclose(outb, refb, atol=1e-5, rtol=1e-5), "mismatch vs reference (batched)"

    # Case 3: `other` as a truthy scalar (torch truthiness) — folded into bias.
    out3 = model_forward(x1, w, b, other=2.5)
    jax.block_until_ready(out3)
    assert jnp.allclose(out3, ref + 2.5, atol=1e-5, rtol=1e-5), "mismatch vs reference (other)"

    print("KERNEL_OK")
</pallas_src>

<mosaic_0001>
module attributes {stable_mosaic.version = 11 : i64} {
  func.func @linear_kernel(%arg0: i32, %arg1: memref<1x4xf32, #tpu.memory_space<vmem>>, %arg2: memref<4x8xf32, #tpu.memory_space<vmem>>, %arg3: memref<1x8xf32, #tpu.memory_space<vmem>>, %arg4: memref<1x8xf32, #tpu.memory_space<vmem>>) attributes {dimension_semantics = [#tpu.dimension_semantics<parallel>], iteration_bounds = array<i64: 1>, scalar_prefetch = 0 : i64, scratch_operands = 0 : i64, tpu.core_type = #tpu.core_type<tc>, window_params = [{transform_indices = @transform_0, window_bounds = array<i64: 1, 4>}, {pipeline_mode = #tpu.pipeline_mode<synchronous>, transform_indices = @transform_1, window_bounds = array<i64: 4, 8>}, {pipeline_mode = #tpu.pipeline_mode<synchronous>, transform_indices = @transform_2, window_bounds = array<i64: 1, 8>}, {transform_indices = @transform_3, window_bounds = array<i64: 1, 8>}]} {
    %c0 = arith.constant 0 : index
    %c0_0 = arith.constant 0 : index
    %0 = vector.load %arg1[%c0, %c0_0] : memref<1x4xf32, #tpu.memory_space<vmem>>, vector<1x4xf32>
    %c0_1 = arith.constant 0 : index
    %c0_2 = arith.constant 0 : index
    %1 = vector.load %arg2[%c0_1, %c0_2] : memref<4x8xf32, #tpu.memory_space<vmem>>, vector<4x8xf32>
    %c0_3 = arith.constant 0 : index
    %c0_4 = arith.constant 0 : index
    %2 = vector.load %arg3[%c0_3, %c0_4] : memref<1x8xf32, #tpu.memory_space<vmem>>, vector<1x8xf32>
    %3 = vector.extract_strided_slice %0 {offsets = [0, 0], sizes = [1, 1], strides = [1, 1]} : vector<1x4xf32> to vector<1x1xf32>
    %4 = vector.extract_strided_slice %1 {offsets = [0, 0], sizes = [1, 8], strides = [1, 1]} : vector<4x8xf32> to vector<1x8xf32>
    %5 = vector.broadcast %3 : vector<1x1xf32> to vector<1x8xf32>
    %6 = arith.mulf %5, %4 : vector<1x8xf32>
    %7 = arith.addf %2, %6 : vector<1x8xf32>
    %8 = vector.extract_strided_slice %0 {offsets = [0, 1], sizes = [1, 1], strides = [1, 1]} : vector<1x4xf32> to vector<1x1xf32>
    %9 = vector.extract_strided_slice %1 {offsets = [1, 0], sizes = [1, 8], strides = [1, 1]} : vector<4x8xf32> to vector<1x8xf32>
    %10 = vector.broadcast %8 : vector<1x1xf32> to vector<1x8xf32>
    %11 = arith.mulf %10, %9 : vector<1x8xf32>
    %12 = arith.addf %7, %11 : vector<1x8xf32>
    %13 = vector.extract_strided_slice %0 {offsets = [0, 2], sizes = [1, 1], strides = [1, 1]} : vector<1x4xf32> to vector<1x1xf32>
    %14 = vector.extract_strided_slice %1 {offsets = [2, 0], sizes = [1, 8], strides = [1, 1]} : vector<4x8xf32> to vector<1x8xf32>
    %15 = vector.broadcast %13 : vector<1x1xf32> to vector<1x8xf32>
    %16 = arith.mulf %15, %14 : vector<1x8xf32>
    %17 = arith.addf %12, %16 : vector<1x8xf32>
    %18 = vector.extract_strided_slice %0 {offsets = [0, 3], sizes = [1, 1], strides = [1, 1]} : vector<1x4xf32> to vector<1x1xf32>
    %19 = vector.extract_strided_slice %1 {offsets = [3, 0], sizes = [1, 8], strides = [1, 1]} : vector<4x8xf32> to vector<1x8xf32>
    %20 = vector.broadcast %18 : vector<1x1xf32> to vector<1x8xf32>
    %21 = arith.mulf %20, %19 : vector<1x8xf32>
    %22 = arith.addf %17, %21 : vector<1x8xf32>
    %c0_5 = arith.constant 0 : index
    %c0_6 = arith.constant 0 : index
    %23 = vector.load %arg4[%c0_5, %c0_6] : memref<1x8xf32, #tpu.memory_space<vmem>>, vector<1x8xf32>
    tpu.vector_store %arg4[%c0_5, %c0_6], %22 {strides = array<i32>} : memref<1x8xf32, #tpu.memory_space<vmem>>, vector<1x8xf32>,
    return
  }
  func.func @transform_0(%arg0: i32) -> (i32, i32) {
    %c0_i32 = arith.constant 0 : i32
    %c0_i32_0 = arith.constant 0 : i32
    return %arg0, %c0_i32 : i32, i32
  }
  func.func @transform_1(%arg0: i32) -> (i32, i32) {
    %c0_i32 = arith.constant 0 : i32
    %c0_i32_0 = arith.constant 0 : i32
    %c0_i32_1 = arith.constant 0 : i32
    return %c0_i32, %c0_i32_0 : i32, i32
  }
  func.func @transform_2(%arg0: i32) -> (i32, i32) {
    %c0_i32 = arith.constant 0 : i32
    %c0_i32_0 = arith.constant 0 : i32
    %c0_i32_1 = arith.constant 0 : i32
    return %c0_i32, %c0_i32_0 : i32, i32
  }
  func.func @transform_3(%arg0: i32) -> (i32, i32) {
    %c0_i32 = arith.constant 0 : i32
    %c0_i32_0 = arith.constant 0 : i32
    return %arg0, %c0_i32 : i32, i32
  }
}

</mosaic_0001>

<llo_original>
// kernel: tpu_custom_call.1
$region0: #{tpu_custom_call.1}
  #allocation0 [shape = 'u32[]', space=smem, size = 0x4, offset = 0x4, fixed_abs, tag = 'smem constant byte address 0x4 - core index']
  #allocation1 [shape = 'u32[144,128]{1,0:T(1,128)}', space=vmem, size = 0x12000, scoped, tag = 'internal scratch']
  %s0 = inlined_call_operand.hbm [shape: f32[1,4], index: 0, kind: input, shape index: {}]
  %s1 = inlined_call_operand.hbm [shape: f32[4,8], index: 1, kind: input, shape index: {}]
  %s2 = inlined_call_operand.vmem [shape: f32[1,8], index: 2, kind: input, shape index: {}]
  %s3 = inlined_call_operand.hbm [shape: f32[1,8], index: 3, kind: output, shape index: {}]
  %s4 = sld [smem:[#allocation0]]
  $region30: #{tpu_custom_call.1} parent=0
    _
  %s6 = ssub.s32 1, %s4
  %s7 = scalar_select 0, %s6, %s4
  $region1: #{tpu_custom_call.1} parent=0
    #allocation2 [shape = 'u8[512]{0}', space=vmem, size = 0x400, scoped, tag = 'input window, operand 0, single buffered']
    #allocation3 [shape = 's32[1]{0}', space=sflag, size = 0x4, scoped, tag = 'scoped memory for tpu_custom_call.1']
    #allocation4 [shape = 's32[1]{0}', space=sflag, size = 0x4, scoped, tag = 'scoped memory for tpu_custom_call.1']
    #allocation5 [shape = 'u8[2048]{0}', space=vmem, size = 0x800, scoped, tag = 'input window, operand 1, single buffered']
    #allocation6 [shape = 's32[1]{0}', space=sflag, size = 0x4, scoped, tag = 'scoped memory for tpu_custom_call.1']
    #allocation7 [shape = 'u8[512]{0}', space=vmem, size = 0x400, scoped, tag = 'output window, operand 0, single buffered']
    %8 = vsyncpa [#allocation3], 0
    %9 = vsyncpa [#allocation6], 0
    %10 = vsyncpa [#allocation4], 0
    // Predicated region
    $region2: #{tpu_custom_call.1} parent=1 // pred_check
      _
    $region3: #{tpu_custom_call.1} parent=1 // pred_check_branch
      %12 = sbr.rel (0) target = $region5
    $region4: #{tpu_custom_call.1} parent=1 // pred_region
      %s14 = ssub.s32 16, 16
      %15 = vsyncadd [#allocation3], %s14
      %s17 = sshll.u32 [#allocation2], 4
      %s18 = int_to_ptr.vmem [resolvable:$true] %s17
      %20 = dma.hbm_to_vmem [thread:$0]  %s0, 16, %s18, [#allocation3]
    $region5: #{tpu_custom_call.1} parent=1 // pred_fallthru
      _
    // Predicated region
    $region6: #{tpu_custom_call.1} parent=1 // pred_check
      _
    $region7: #{tpu_custom_call.1} parent=1 // pred_check_branch
      %22 = sbr.rel (0) target = $region9
    $region8: #{tpu_custom_call.1} parent=1 // pred_region
      %s24 = ssub.s32 64, 64
      %25 = vsyncadd [#allocation6], %s24
      %s27 = sshll.u32 [#allocation5], 4
      %s28 = int_to_ptr.vmem [resolvable:$true] %s27
      %30 = dma.hbm_to_vmem [thread:$0]  %s1, 64, %s28, [#allocation6]
    $region9: #{tpu_custom_call.1} parent=1 // pred_fallthru
      _
    // Predicated region
    $region10: #{tpu_custom_call.1} parent=1 // pred_check
      _
    $region11: #{tpu_custom_call.1} parent=1 // pred_check_branch
      %32 = sbr.rel (0) target = $region13
    $region12: #{tpu_custom_call.1} parent=1 // pred_region
      _
    $region13: #{tpu_custom_call.1} parent=1 // pred_fallthru
      _
    // Predicated region
    $region14: #{tpu_custom_call.1} parent=1 // pred_check
      _
    $region15: #{tpu_custom_call.1} parent=1 // pred_check_branch
      %34 = sbr.rel (0) target = $region17
    $region16: #{tpu_custom_call.1} parent=1 // pred_region
      %35 = dma.done [#allocation3], 16
    $region17: #{tpu_custom_call.1} parent=1 // pred_fallthru
      _
    // Predicated region
    $region18: #{tpu_custom_call.1} parent=1 // pred_check
      _
    $region19: #{tpu_custom_call.1} parent=1 // pred_check_branch
      %37 = sbr.rel (0) target = $region21
    $region20: #{tpu_custom_call.1} parent=1 // pred_region
      %38 = dma.done [#allocation6], 64
    $region21: #{tpu_custom_call.1} parent=1 // pred_fallthru
      _
    %v39 = vld [vmem:[#allocation2] sm:$0x1]
    %v40 = vld [vmem:[#allocation5] sm:$0xf]
    %v41 = vld [vmem:[%s2] sm:$0x1]
    %43 = vset.pattern.permute.xlu0 0
    %44 = vperm.xlu0 %43, %v39
    %v45 = vpop.permute.xlu0 %44
    %v47 = vlaneseq
    %v48 = vshrl.u32 %v47, 7
    %v49 = vsub.s32 0, %v48
    %v50 = vrot.slane %v45, %v49
    %v51 = vmul.f32 %v50, %v40
    %v52 = vadd.f32 %v41, %v51
    %53 = vset.pattern.permute.xlu0 1
    %54 = vperm.xlu0 %53, %v39
    %v55 = vpop.permute.xlu0 %54
    %v57 = vlaneseq
    %v58 = vshrl.u32 %v57, 7
    %v59 = vsub.s32 0, %v58
    %v60 = vrot.slane %v55, %v59
    %v61 = vmul.f32 %v60, %v40
    %v64 = vunpack.c.l.s4 1966171168
    %v65 = vunpack.c.0.s8 %v64
    %v66 = vlaneseq
    %v67 = vshrl.u32 %v66, 7
    %v68 = vsub.s32 %v65, %v67
    %v69 = vrot.slane %v61, %v68
    %v70 = vcombine.high %v69, %v69
    %v72 = vunpack.c.l.s4 1966171168
    %v73 = vunpack.c.0.s8 %v72
    %v74 = vlaneseq
    %v75 = vshrl.u32 %v74, 7
    %v76 = vsub.s32 %v73, %v75
    %v77 = vrot.slane %v70, %v76
    %v79 = vadd.f32 %v52, %v77
    %80 = vset.pattern.permute.xlu0 2
    %81 = vperm.xlu0 %80, %v39
    %v82 = vpop.permute.xlu0 %81
    %v84 = vlaneseq
    %v85 = vshrl.u32 %v84, 7
    %v86 = vsub.s32 0, %v85
    %v87 = vrot.slane %v82, %v86
    %v88 = vmul.f32 %v87, %v40
    %v91 = vunpack.c.l.s4 1966171168
    %v92 = vunpack.c.0.s8 %v91
    %v93 = vlaneseq
    %v94 = vshrl.u32 %v93, 7
    %v95 = vsub.s32 %v92, %v94
    %v96 = vrot.slane %v88, %v95
    %v98 = vunpack.c.l.s4 1966171168
    %v99 = vunpack.c.0.s8 %v98
    %v100 = vlaneseq
    %v101 = vshrl.u32 %v100, 7
    %v102 = vsub.s32 %v99, %v101
    %v103 = vrot.slane %v96, %v102
    %v104 = vcombine.high %v103, %v103
    %v106 = vadd.f32 %v79, %v104
    %107 = vset.pattern.permute.xlu0 3
    %108 = vperm.xlu0 %107, %v39
    %v109 = vpop.permute.xlu0 %108
    %v111 = vlaneseq
    %v112 = vshrl.u32 %v111, 7
    %v113 = vsub.s32 0, %v112
    %v114 = vrot.slane %v109, %v113
    %v115 = vmul.f32 %v114, %v40
    %v118 = vunpack.c.l.s4 1966171168
    %v119 = vunpack.c.0.s8 %v118
    %v120 = vlaneseq
    %v121 = vshrl.u32 %v120, 7
    %v122 = vsub.s32 %v119, %v121
    %v123 = vrot.slane %v115, %v122
    %v124 = vcombine.high %v123, %v123
    %v126 = vunpack.c.l.s4 1966171168
    %v127 = vunpack.c.0.s8 %v126
    %v128 = vlaneseq
    %v129 = vshrl.u32 %v128, 7
    %v130 = vsub.s32 %v127, %v129
    %v131 = vrot.slane %v124, %v130
    %v132 = vcombine.high %v131, %v131
    %v134 = vadd.f32 %v106, %v132
    %vm135 = vcmask 57344
    %136 = vst.msk [vmem:[#allocation7] sm:$0x1] %vm135, %v134
    // Predicated region
    $region22: #{tpu_custom_call.1} parent=1 // pred_check
      _
    $region23: #{tpu_custom_call.1} parent=1 // pred_check_branch
      %138 = sbr.rel (0) target = $region25
    $region24: #{tpu_custom_call.1} parent=1 // pred_region
      %s140 = ssub.s32 16, 16
      %141 = vsyncadd [#allocation4], %s140
      %s143 = sshll.u32 [#allocation7], 4
      %s144 = int_to_ptr.vmem [resolvable:$true] %s143
      %146 = dma.vmem_to_hbm [thread:$0]  %s144, 16, %s3, [#allocation4]
    $region25: #{tpu_custom_call.1} parent=1 // pred_fallthru
      _
    // Predicated region
    $region26: #{tpu_custom_call.1} parent=1 // pred_check
      _
    $region27: #{tpu_custom_call.1} parent=1 // pred_check_branch
      %148 = sbr.rel (0) target = $region29
    $region28: #{tpu_custom_call.1} parent=1 // pred_region
      %149 = dma.done [#allocation4], 16
    $region29: #{tpu_custom_call.1} parent=1 // pred_fallthru
      _
    %150 = vsyncpa [#allocation3], 1
    %151 = vsyncpa [#allocation6], 1
    %152 = vsyncpa [#allocation4], 1

</llo_original>
